<compile_context>
chip_gen: v5e
topology: v5e:2x2
jax: 0.10.0
libtpu: 0.0.40
codegen_flags: <defaults>
</compile_context>

<pallas_src>
import math

import jax
import jax.numpy as jnp
from jax.experimental import pallas as pl
from jax.experimental.pallas import tpu as pltpu


def _round_up(x, m):
    return (x + m - 1) // m * m


def _conv_stats_kernel(p_ref, w_ref, z_ref, stats_ref):
    """Per row-tile: conv-as-single-matmul + per-channel partial (sum, sum_sq)."""
    # p_ref: (tm, Kc) im2col rows; w_ref: (Kc, Cp) folded weight; both in input dtype.
    z = jnp.dot(p_ref[...], w_ref[...], preferred_element_type=jnp.float32)   # (tm, Cp) f32
    z_ref[...] = z
    s = jnp.sum(z, axis=0, keepdims=True)          # (1, Cp)
    ss = jnp.sum(z * z, axis=0, keepdims=True)     # (1, Cp)  one-pass stats (E[x^2])
    stats_ref[...] = jnp.concatenate([s, ss], axis=0)


def _make_bn_prelu_kernel(count, eps, linear):
    inv_count = 1.0 / float(count)

    def kernel(z_ref, tot_ref, gamma_ref, beta_ref, alpha_ref, o_ref):
        z = z_ref[...]                                   # (tm, Cp) f32 pre-BN conv output
        tot = tot_ref[...]                               # (2, Cp): row0 = sum, row1 = sum_sq
        mean = tot[0:1, :] * inv_count                   # (1, Cp)
        var = tot[1:2, :] * inv_count - mean * mean      # E[x^2] - E[x]^2, all f32
        var = jnp.maximum(var, 0.0)
        scale = gamma_ref[...] * jax.lax.rsqrt(var + eps)
        shift = beta_ref[...] - mean * scale
        y = z * scale + shift
        if not linear:
            y = jnp.where(y > 0, y, alpha_ref[...] * y)  # per-channel PReLU
        o_ref[...] = y.astype(o_ref.dtype)

    return kernel


def conv_block(x_nchw, weight_oihw, gamma, beta, alpha=None, *,
               stride=1, padding=1, linear=False, eps=1e-5, tile_rows=256):
    """PyTorch-compatible ConvBlock forward: NCHW in, NCHW out."""
    N, Cin, H, W = x_nchw.shape
    Cout, Cin_w, K, K2 = weight_oihw.shape
    assert Cin_w == Cin and K == K2  # dw=True (grouped) not supported here
    Ho = (H + 2 * padding - K) // stride + 1
    Wo = (W + 2 * padding - K) // stride + 1
    M = N * Ho * Wo
    Kc = K * K * Cin
    Cp = _round_up(Cout, 128)          # lane-dense channel dim -> full-width stores

    # ---------- boundary layout plumbing (glue, not the hot path) ----------
    x = jnp.transpose(x_nchw, (0, 2, 3, 1))                                    # NHWC
    x = jnp.pad(x, ((0, 0), (padding, padding), (padding, padding), (0, 0)))
    taps = []
    for kh in range(K):
        for kw in range(K):
            taps.append(x[:, kh:kh + (Ho - 1) * stride + 1:stride,
                             kw:kw + (Wo - 1) * stride + 1:stride, :])
    patches = jnp.stack(taps, axis=3).reshape(M, Kc)                           # im2col (M, K*K*Cin)

    w = jnp.transpose(weight_oihw, (2, 3, 1, 0)).reshape(Kc, Cout)             # (kh,kw,cin) major order
    w = jnp.pad(w, ((0, 0), (0, Cp - Cout))).astype(patches.dtype)

    gamma_p = jnp.pad(gamma.astype(jnp.float32), (0, Cp - Cout)).reshape(1, Cp)
    beta_p = jnp.pad(beta.astype(jnp.float32), (0, Cp - Cout)).reshape(1, Cp)
    if alpha is None:
        alpha = jnp.zeros((Cout,), jnp.float32)
    alpha_p = jnp.pad(alpha.astype(jnp.float32), (0, Cp - Cout)).reshape(1, Cp)

    tm = min(tile_rows, _round_up(M, 8))        # row tile; bump for real layers (512-2048)
    M_pad = _round_up(M, tm)
    T = M_pad // tm
    if M_pad != M:
        patches = jnp.pad(patches, ((0, M_pad - M), (0, 0)))  # zero rows -> no effect on stats

    cparams = pltpu.CompilerParams(
        dimension_semantics=("parallel",),      # shard grid across v7x's 2 TensorCores
        vmem_limit_bytes=48 * 1024 * 1024,      # > 32 MiB scoped default, < v7x 64 MiB physical
    )

    # ---------- pass 1: conv (one im2col matmul per tile) + partial BN stats ----------
    z, partial = pl.pallas_call(
        _conv_stats_kernel,
        out_shape=(jax.ShapeDtypeStruct((M_pad, Cp), jnp.float32),
                   jax.ShapeDtypeStruct((T, 2, Cp), jnp.float32)),
        grid_spec=pltpu.PrefetchScalarGridSpec(
            num_scalar_prefetch=0,
            grid=(T,),
            in_specs=[pl.BlockSpec((tm, Kc), lambda i: (i, 0)),
                      pl.BlockSpec((Kc, Cp), lambda i: (0, 0))],
            out_specs=[pl.BlockSpec((tm, Cp), lambda i: (i, 0)),
                       pl.BlockSpec((None, 2, Cp), lambda i: (i, 0, 0))],
        ),
        compiler_params=cparams,
    )(patches, w)

    # Tiny cross-tile reduction of per-channel (sum, sum_sq); heavy work stays in Pallas.
    tot = jnp.sum(partial, axis=0)                                             # (2, Cp)

    # ---------- pass 2: BatchNorm (batch statistics) + PReLU, lane-dense elementwise ----------
    out2d = pl.pallas_call(
        _make_bn_prelu_kernel(M, eps, linear),
        out_shape=jax.ShapeDtypeStruct((M_pad, Cp), x_nchw.dtype),
        grid_spec=pltpu.PrefetchScalarGridSpec(
            num_scalar_prefetch=0,
            grid=(T,),
            in_specs=[pl.BlockSpec((tm, Cp), lambda i: (i, 0)),
                      pl.BlockSpec((2, Cp), lambda i: (0, 0)),
                      pl.BlockSpec((1, Cp), lambda i: (0, 0)),
                      pl.BlockSpec((1, Cp), lambda i: (0, 0)),
                      pl.BlockSpec((1, Cp), lambda i: (0, 0))],
            out_specs=pl.BlockSpec((tm, Cp), lambda i: (i, 0)),
        ),
        compiler_params=cparams,
    )(z, tot, gamma_p, beta_p, alpha_p)

    out = out2d[:M, :Cout].reshape(N, Ho, Wo, Cout)
    return jnp.transpose(out, (0, 3, 1, 2))                                    # back to NCHW


def conv_block_reference(x, w, gamma, beta, alpha, *, stride, padding, linear, eps=1e-5):
    """Pure-JAX reference matching the PyTorch module's forward."""
    y = jax.lax.conv_general_dilated(
        x, w, window_strides=(stride, stride),
        padding=[(padding, padding), (padding, padding)],
        dimension_numbers=("NCHW", "OIHW", "NCHW"),
        precision=jax.lax.Precision.HIGHEST)
    mean = jnp.mean(y, axis=(0, 2, 3), keepdims=True)
    var = jnp.mean((y - mean) ** 2, axis=(0, 2, 3), keepdims=True)
    y = (y - mean) / jnp.sqrt(var + eps)
    y = y * gamma.reshape(1, -1, 1, 1) + beta.reshape(1, -1, 1, 1)
    if not linear:
        y = jnp.where(y > 0, y, alpha.reshape(1, -1, 1, 1) * y)
    return y


if __name__ == "__main__":
    # ConvBlock(inp=4, oup=8, k=3, s=1, p=1, dw=False, linear=False)
    inp, oup, K, S, P = 4, 8, 3, 1, 1
    N, H, W = 2, 16, 16

    key = jax.random.PRNGKey(0)
    k1, k2, k3, k4, k5 = jax.random.split(key, 5)

    x = jax.random.normal(k1, (N, inp, H, W), jnp.float32)

    # Deterministic, PyTorch-like initializations.
    fan_in = inp * K * K
    bound = 1.0 / math.sqrt(fan_in)
    weight = jax.random.uniform(k2, (oup, inp, K, K), jnp.float32, -bound, bound)
    gamma = jax.random.uniform(k3, (oup,), jnp.float32, 0.5, 1.5)
    beta = 0.1 * jax.random.normal(k4, (oup,), jnp.float32)
    alpha = jnp.full((oup,), 0.25, jnp.float32) + 0.01 * jax.random.normal(k5, (oup,), jnp.float32)

    out = conv_block(x, weight, gamma, beta, alpha, stride=S, padding=P, linear=False)
    out = jax.block_until_ready(out)

    ref = conv_block_reference(x, weight, gamma, beta, alpha,
                               stride=S, padding=P, linear=False)
    ref = jax.block_until_ready(ref)

    assert out.shape == (N, oup, H, W), out.shape
    max_err = float(jnp.max(jnp.abs(out - ref)))
    assert jnp.allclose(out, ref, rtol=2e-4, atol=2e-4), max_err

    print("KERNEL_OK")
</pallas_src>

<mosaic_0001>
module attributes {stable_mosaic.version = 11 : i64} {
  func.func @_conv_stats_kernel(%arg0: i32, %arg1: memref<256x36xf32, #tpu.memory_space<vmem>>, %arg2: memref<36x128xf32, #tpu.memory_space<vmem>>, %arg3: memref<256x128xf32, #tpu.memory_space<vmem>>, %arg4: memref<1x2x128xf32, #tpu.memory_space<vmem>>) attributes {dimension_semantics = [#tpu.dimension_semantics<parallel>], iteration_bounds = array<i64: 2>, scalar_prefetch = 0 : i64, scratch_operands = 0 : i64, tpu.core_type = #tpu.core_type<tc>, window_params = [{transform_indices = @transform_0, window_bounds = array<i64: 256, 36>}, {pipeline_mode = #tpu.pipeline_mode<synchronous>, transform_indices = @transform_1, window_bounds = array<i64: 36, 128>}, {transform_indices = @transform_2, window_bounds = array<i64: 256, 128>}, {transform_indices = @transform_3, window_bounds = array<i64: 1, 2, 128>}]} {
    %c0 = arith.constant 0 : index
    %c0_0 = arith.constant 0 : index
    %0 = vector.load %arg1[%c0, %c0_0] : memref<256x36xf32, #tpu.memory_space<vmem>>, vector<256x36xf32>
    %c0_1 = arith.constant 0 : index
    %c0_2 = arith.constant 0 : index
    %1 = vector.load %arg2[%c0_1, %c0_2] : memref<36x128xf32, #tpu.memory_space<vmem>>, vector<36x128xf32>
    %cst = arith.constant dense<0.000000e+00> : vector<256x128xf32>
    %2 = tpu.matmul %0, %1, %cst {dimension_numbers = #tpu.dot_dimension_numbers<[1], [0], [0], [1], [0, 0, 1, 1], [], []>} : vector<256x36xf32>, vector<36x128xf32>, vector<256x128xf32> -> vector<256x128xf32>
    %c0_3 = arith.constant 0 : index
    %c0_4 = arith.constant 0 : index
    %3 = vector.load %arg3[%c0_3, %c0_4] : memref<256x128xf32, #tpu.memory_space<vmem>>, vector<256x128xf32>
    tpu.vector_store %arg3[%c0_3, %c0_4], %2 {strides = array<i32>} : memref<256x128xf32, #tpu.memory_space<vmem>>, vector<256x128xf32>,
    %cst_5 = arith.constant dense<0.000000e+00> : vector<128xf32>
    %4 = vector.multi_reduction <add>, %2, %cst_5 [0] : vector<256x128xf32> to vector<128xf32>
    %5 = vector.shape_cast %4 : vector<128xf32> to vector<1x128xf32>
    %6 = arith.mulf %2, %2 : vector<256x128xf32>
    %cst_6 = arith.constant dense<0.000000e+00> : vector<128xf32>
    %7 = vector.multi_reduction <add>, %6, %cst_6 [0] : vector<256x128xf32> to vector<128xf32>
    %8 = vector.shape_cast %7 : vector<128xf32> to vector<1x128xf32>
    %9 = tpu.concatenate %5, %8 in 0 : vector<1x128xf32>, vector<1x128xf32> -> vector<2x128xf32>
    %c0_7 = arith.constant 0 : index
    %c0_8 = arith.constant 0 : index
    %c0_9 = arith.constant 0 : index
    %10 = vector.load %arg4[%c0_7, %c0_8, %c0_9] : memref<1x2x128xf32, #tpu.memory_space<vmem>>, vector<1x2x128xf32>
    %11 = vector.shape_cast %10 : vector<1x2x128xf32> to vector<2x128xf32>
    %12 = vector.shape_cast %9 : vector<2x128xf32> to vector<1x2x128xf32>
    tpu.vector_store %arg4[%c0_7, %c0_8, %c0_9], %12 {strides = array<i32>} : memref<1x2x128xf32, #tpu.memory_space<vmem>>, vector<1x2x128xf32>,
    return
  }
  func.func @transform_0(%arg0: i32) -> (i32, i32) {
    %c0_i32 = arith.constant 0 : i32
    %c0_i32_0 = arith.constant 0 : i32
    return %arg0, %c0_i32 : i32, i32
  }
  func.func @transform_1(%arg0: i32) -> (i32, i32) {
    %c0_i32 = arith.constant 0 : i32
    %c0_i32_0 = arith.constant 0 : i32
    %c0_i32_1 = arith.constant 0 : i32
    return %c0_i32, %c0_i32_0 : i32, i32
  }
  func.func @transform_2(%arg0: i32) -> (i32, i32) {
    %c0_i32 = arith.constant 0 : i32
    %c0_i32_0 = arith.constant 0 : i32
    return %arg0, %c0_i32 : i32, i32
  }
  func.func @transform_3(%arg0: i32) -> (i32, i32, i32) {
    %c0_i32 = arith.constant 0 : i32
    %c0_i32_0 = arith.constant 0 : i32
    %c0_i32_1 = arith.constant 0 : i32
    return %arg0, %c0_i32, %c0_i32_0 : i32, i32, i32
  }
}

</mosaic_0001>

<llo_original>
// kernel: tpu_custom_call.1
$region0: #{tpu_custom_call.1}
  #allocation0 [shape = 'u32[]', space=smem, size = 0x4, offset = 0x4, fixed_abs, tag = 'smem constant byte address 0x4 - core index']
  #allocation1 [shape = 'u32[72,128]{1,0:T(1,128)}', space=vmem, size = 0x9000, scoped, tag = 'internal scratch']
  %s0 = inlined_call_operand.vmem [shape: f32[512,36], index: 0, kind: input, shape index: {}]
  %s1 = inlined_call_operand.vmem [shape: f32[36,128], index: 1, kind: input, shape index: {}]
  %s2 = inlined_call_operand.hbm [shape: f32[512,128], index: 2, kind: output, shape index: {0}]
  %s3 = inlined_call_operand.hbm [shape: f32[2,2,128], index: 3, kind: output, shape index: {1}]
  %4 = xla_tuple %s2, %s3
  %s5 = sld [smem:[#allocation0]]
  $region49: #{tpu_custom_call.1} parent=0
    _
  %s7 = ssub.s32 1, %s5
  %s8 = scalar_select 0, %s7, %s5
  $region1: #{tpu_custom_call.1} parent=0
    #allocation2 [shape = 'u8[262144]{0}', space=vmem, size = 0x40000, scoped, tag = 'output window, operand 0']
    #allocation3 [shape = 's32[2]{0}', space=sflag, size = 0x8, scoped, tag = 'scoped memory for tpu_custom_call.1']
    #allocation4 [shape = 'u8[2048]{0}', space=vmem, size = 0x800, scoped, tag = 'output window, operand 1']
    #allocation5 [shape = 's32[2]{0}', space=sflag, size = 0x8, scoped, tag = 'scoped memory for tpu_custom_call.1']
    %9 = vsyncpa [#allocation3], 0
    %s10 = scalar_lea.sflag [#allocation3], 1
    %11 = vsyncpa %s10, 0
    %12 = vsyncpa [#allocation5], 0
    %s13 = scalar_lea.sflag [#allocation5], 1
    %14 = vsyncpa %s13, 0
    loop: start=0, step=1, limit=4
    $region2: #{tpu_custom_call.1} parent=1 // loop_pre_header
      _
    $region3: #{tpu_custom_call.1} parent=1 // loop_header
      %s16 = sphi 0, %s20
      %p17 = scmp.ge.s32.totalorder %s16, 4
      %s26 = sphi 0, %s28
      %s29 = sphi 0, %s26
      %s30 = sphi 0, %s29
      %s46 = sphi 0, %s30
      %s50 = sphi 0, %s50
      %s52 = sphi 0, %s50
      %s53 = sphi 0, %s52
      %s67 = sphi 0, %s53
      %s73 = sphi 0, %s75
      %s76 = sphi 0, %s73
      %s77 = sphi 0, %s76
      %s93 = sphi 0, %s77
      %s99 = sphi 0, %s101
      %s102 = sphi 0, %s99
      %s103 = sphi 0, %s102
      %s119 = sphi 0, %s103
    $region4: #{tpu_custom_call.1} parent=1 // loop_header_branch
      %19 = sbr.rel (%p17) target = $region8
    $region5: #{tpu_custom_call.1} parent=1 // loop_body
      %s21 = ssub.s32 %s16, 1
      %s22 = ssub.s32 %s16, 2
      %s23 = sadd.s32 %s16, 1
      %s24 = ssub.s32 %s16, %s23
      %p25 = scmp.eq.s32.totalorder %s24, 0
      %s27 = sadd.s32 %s26, 1
      %s28 = scalar_select %p25, %s26, %s27
      %p31 = pneg %p25
      %p32 = scmp.eq.s32.totalorder %s16, 1
      %p33 = por %p31, %p32
      %p34 = scmp.ne.s32.totalorder %s26, %s29
      %p35 = scmp.eq.s32.totalorder %s16, 0
      %p36 = por %p34, %p35
      %p37 = scmp.ne.s32.totalorder %s26, %s29
      %p38 = scmp.eq.s32.totalorder %s21, 1
      %p39 = por %p37, %p38
      %p40 = scmp.ne.s32.totalorder %s29, %s30
      %p41 = scmp.eq.s32.totalorder %s21, 0
      %p42 = por %p40, %p41
      %p43 = scmp.ne.s32.totalorder %s29, %s30
      %p44 = scmp.eq.s32.totalorder %s22, 1
      %p45 = por %p43, %p44
      %p47 = scmp.ne.s32.totalorder %s30, %s46
      %p48 = scmp.eq.s32.totalorder %s22, 0
      %p49 = por %p47, %p48
      %s51 = sadd.s32 %s50, 1
      %p54 = scmp.eq.s32.totalorder %s16, 1
      %p55 = scmp.ne.s32.totalorder %s50, %s52
      %p56 = scmp.eq.s32.totalorder %s16, 0
      %p57 = por %p55, %p56
      %p58 = scmp.ne.s32.totalorder %s50, %s52
      %p59 = scmp.eq.s32.totalorder %s21, 1
      %p60 = por %p58, %p59
      %p61 = scmp.ne.s32.totalorder %s52, %s53
      %p62 = scmp.eq.s32.totalorder %s21, 0
      %p63 = por %p61, %p62
      %p64 = scmp.ne.s32.totalorder %s52, %s53
      %p65 = scmp.eq.s32.totalorder %s22, 1
      %p66 = por %p64, %p65
      %p68 = scmp.ne.s32.totalorder %s53, %s67
      %p69 = scmp.eq.s32.totalorder %s22, 0
      %p70 = por %p68, %p69
      %s71 = ssub.s32 %s16, %s23
      %p72 = scmp.eq.s32.totalorder %s71, 0
      %s74 = sadd.s32 %s73, 1
      %s75 = scalar_select %p72, %s73, %s74
      %p78 = pneg %p72
      %p79 = scmp.eq.s32.totalorder %s16, 1
      %p80 = por %p78, %p79
      %p81 = scmp.ne.s32.totalorder %s73, %s76
      %p82 = scmp.eq.s32.totalorder %s16, 0
      %p83 = por %p81, %p82
      %p84 = scmp.ne.s32.totalorder %s73, %s76
      %p85 = scmp.eq.s32.totalorder %s21, 1
      %p86 = por %p84, %p85
      %p87 = scmp.ne.s32.totalorder %s76, %s77
      %p88 = scmp.eq.s32.totalorder %s21, 0
      %p89 = por %p87, %p88
      %p90 = scmp.ne.s32.totalorder %s76, %s77
      %p91 = scmp.eq.s32.totalorder %s22, 1
      %p92 = por %p90, %p91
      %p94 = scmp.ne.s32.totalorder %s77, %s93
      %p95 = scmp.eq.s32.totalorder %s22, 0
      %p96 = por %p94, %p95
      %s97 = ssub.s32 %s16, %s23
      %p98 = scmp.eq.s32.totalorder %s97, 0
      %s100 = sadd.s32 %s99, 1
      %s101 = scalar_select %p98, %s99, %s100
      %p104 = pneg %p98
      %p105 = scmp.eq.s32.totalorder %s16, 1
      %p106 = por %p104, %p105
      %p107 = scmp.ne.s32.totalorder %s99, %s102
      %p108 = scmp.eq.s32.totalorder %s16, 0
      %p109 = por %p107, %p108
      %p110 = scmp.ne.s32.totalorder %s99, %s102
      %p111 = scmp.eq.s32.totalorder %s21, 1
      %p112 = por %p110, %p111
      %p113 = scmp.ne.s32.totalorder %s102, %s103
      %p114 = scmp.eq.s32.totalorder %s21, 0
      %p115 = por %p113, %p114
      %p116 = scmp.ne.s32.totalorder %s102, %s103
      %p117 = scmp.eq.s32.totalorder %s22, 1
      %p118 = por %p116, %p117
      %p120 = scmp.ne.s32.totalorder %s103, %s119
      %p121 = scmp.eq.s32.totalorder %s22, 0
      %p122 = por %p120, %p121
      %p123 = scmp.le.s32.totalorder 1, %s16
      %p124 = scmp.lt.s32.totalorder %s16, 3
      %p125 = pnand %p123, %p124
      %p126 = pneg %p125
      // Predicated region
      $region9: #{tpu_custom_call.1} parent=5 // pred_check
        _
      $region10: #{tpu_custom_call.1} parent=5 // pred_check_branch
        %128 = sbr.rel (%p125) target = $region12
      $region11: #{tpu_custom_call.1} parent=5 // pred_region
        %s129 = ssub.s32 %s16, 1
        // Predicated region
        $region13: #{tpu_custom_call.1} parent=11 // pred_check
          %p130 = pneg %p63
        $region14: #{tpu_custom_call.1} parent=11 // pred_check_branch
          %132 = sbr.rel (%p130) target = $region16
        $region15: #{tpu_custom_call.1} parent=11 // pred_region
          _
        $region16: #{tpu_custom_call.1} parent=11 // pred_fallthru
          _
      $region12: #{tpu_custom_call.1} parent=5 // pred_fallthru
        _
      %p133 = scmp.lt.s32.totalorder %s16, 2
      // Predicated region
      $region17: #{tpu_custom_call.1} parent=5 // pred_check
        %p134 = pneg %p133
      $region18: #{tpu_custom_call.1} parent=5 // pred_check_branch
        %136 = sbr.rel (%p134) target = $region20
      $region19: #{tpu_custom_call.1} parent=5 // pred_region
        // Predicated region
        $region21: #{tpu_custom_call.1} parent=19 // pred_check
          %p137 = pneg %p36
        $region22: #{tpu_custom_call.1} parent=19 // pred_check_branch
          %139 = sbr.rel (%p137) target = $region24
        $region23: #{tpu_custom_call.1} parent=19 // pred_region
          %s140 = smul.u32 32, %s16
          %p141 = scmp.lt.s32.totalorder %s140, 63
          %s142 = scalar_select %p141, %s140, 63
          %s143 = smul.addr %s142, 8
          %s144 = scalar_lea.vmem %s0, %s143
          %s145 = smul.u32 32, %s16
        $region24: #{tpu_custom_call.1} parent=19 // pred_fallthru
          _
      $region20: #{tpu_custom_call.1} parent=5 // pred_fallthru
        _
      %p146 = scmp.le.s32.totalorder 1, %s16
      %p147 = scmp.lt.s32.totalorder %s16, 3
      %p148 = pnand %p146, %p147
      %p149 = pneg %p148
      // Predicated region
      $region25: #{tpu_custom_call.1} parent=5 // pred_check
        _
      $region26: #{tpu_custom_call.1} parent=5 // pred_check_branch
        %151 = sbr.rel (%p148) target = $region28
      $region27: #{tpu_custom_call.1} parent=5 // pred_region
        %s152 = ssub.s32 %s16, 1
        %s153 = smul.u32 32, %s21
        %p154 = scmp.lt.s32.totalorder %s153, 63
        %s155 = scalar_select %p154, %s153, 63
        %s156 = smul.addr %s155, 8
        %s157 = scalar_lea.vmem %s0, %s156
        %p158 = pneg %p42
        %p159 = pneg %p39
        %p160 = pneg %p63
        %p161 = pneg %p60
        %p162 = pneg %p89
        %p163 = pneg %p86
        %s164 = sand.u32 %s76, 1
        %s165 = scalar_lea.sflag [#allocation3], %s164
        %s166 = sand.u32 %s76, 1
        %s167 = smul.addr %s166, 256
        %s168 = scalar_lea.vmem [#allocation2], %s167
        %p169 = pneg %p115
        %p170 = pneg %p112
        %s171 = sand.u32 %s102, 1
        %s172 = scalar_lea.sflag [#allocation5], %s171
        %s173 = sand.u32 %s102, 1
        %s174 = smul.addr %s173, 2
        %s175 = scalar_lea.vmem [#allocation4], %s174
        %s176 = smul.u32 32, %s21
        %p177 = scmp.lt.s32.totalorder %s176, 63
        %s178 = scalar_select %p177, %s176, 63
        %s179 = smul.addr %s178, 8
        %s180 = scalar_lea.vmem %s0, %s179
        %s181 = smul.u32 32, %s21
        %s182 = smul.u32 32, %s21
        %v183 = vld [vmem:[%s180] sm:$0xff]
        %v184 = vld [vmem:[%s180 + $0x8] sm:$0xff]
        %v185 = vld [vmem:[%s180 + $0x10] sm:$0xff]
        %v186 = vld [vmem:[%s180 + $0x18] sm:$0xff]
        %v187 = vld [vmem:[%s180 + $0x20] sm:$0xff]
        %v188 = vld [vmem:[%s180 + $0x28] sm:$0xff]
        %v189 = vld [vmem:[%s180 + $0x30] sm:$0xff]
        %v190 = vld [vmem:[%s180 + $0x38] sm:$0xff]
        %v191 = vld [vmem:[%s180 + $0x40] sm:$0xff]
        %v192 = vld [vmem:[%s180 + $0x48] sm:$0xff]
        %v193 = vld [vmem:[%s180 + $0x50] sm:$0xff]
        %v194 = vld [vmem:[%s180 + $0x58] sm:$0xff]
        %v195 = vld [vmem:[%s180 + $0x60] sm:$0xff]
        %v196 = vld [vmem:[%s180 + $0x68] sm:$0xff]
        %v197 = vld [vmem:[%s180 + $0x70] sm:$0xff]
        %v198 = vld [vmem:[%s180 + $0x78] sm:$0xff]
        %v199 = vld [vmem:[%s180 + $0x80] sm:$0xff]
        %v200 = vld [vmem:[%s180 + $0x88] sm:$0xff]
        %v201 = vld [vmem:[%s180 + $0x90] sm:$0xff]
        %v202 = vld [vmem:[%s180 + $0x98] sm:$0xff]
        %v203 = vld [vmem:[%s180 + $0xa0] sm:$0xff]
        %v204 = vld [vmem:[%s180 + $0xa8] sm:$0xff]
        %v205 = vld [vmem:[%s180 + $0xb0] sm:$0xff]
        %v206 = vld [vmem:[%s180 + $0xb8] sm:$0xff]
        %v207 = vld [vmem:[%s180 + $0xc0] sm:$0xff]
        %v208 = vld [vmem:[%s180 + $0xc8] sm:$0xff]
        %v209 = vld [vmem:[%s180 + $0xd0] sm:$0xff]
        %v210 = vld [vmem:[%s180 + $0xd8] sm:$0xff]
        %v211 = vld [vmem:[%s180 + $0xe0] sm:$0xff]
        %v212 = vld [vmem:[%s180 + $0xe8] sm:$0xff]
        %v213 = vld [vmem:[%s180 + $0xf0] sm:$0xff]
        %v214 = vld [vmem:[%s180 + $0xf8] sm:$0xff]
        %v215 = vld [vmem:[%s1] sm:$0xff]
        %v216 = vld [vmem:[%s1 + $0x8] sm:$0xff]
        %v217 = vld [vmem:[%s1 + $0x10] sm:$0xff]
        %v218 = vld [vmem:[%s1 + $0x18] sm:$0xff]
        %v219 = vld [vmem:[%s1 + $0x20] sm:$0xf]
        %vm220 = vcmask 293888
        %v222 = vsel %vm220, %v183, 0
        %v225 = vsel %vm220, %v184, 0
        %v228 = vsel %vm220, %v185, 0
        %v231 = vsel %vm220, %v186, 0
        %v234 = vsel %vm220, %v187, 0
        %v237 = vsel %vm220, %v188, 0
        %v240 = vsel %vm220, %v189, 0
        %v243 = vsel %vm220, %v190, 0
        %v246 = vsel %vm220, %v191, 0
        %v249 = vsel %vm220, %v192, 0
        %v252 = vsel %vm220, %v193, 0
        %v255 = vsel %vm220, %v194, 0
        %v258 = vsel %vm220, %v195, 0
        %v261 = vsel %vm220, %v196, 0
        %v264 = vsel %vm220, %v197, 0
        %v267 = vsel %vm220, %v198, 0
        %v270 = vsel %vm220, %v199, 0
        %v273 = vsel %vm220, %v200, 0
        %v276 = vsel %vm220, %v201, 0
        %v279 = vsel %vm220, %v202, 0
        %v282 = vsel %vm220, %v203, 0
        %v285 = vsel %vm220, %v204, 0
        %v288 = vsel %vm220, %v205, 0
        %v291 = vsel %vm220, %v206, 0
        %v294 = vsel %vm220, %v207, 0
        %v297 = vsel %vm220, %v208, 0
        %v300 = vsel %vm220, %v209, 0
        %v303 = vsel %vm220, %v210, 0
        %v306 = vsel %vm220, %v211, 0
        %v309 = vsel %vm220, %v212, 0
        %v312 = vsel %vm220, %v213, 0
        %v315 = vsel %vm220, %v214, 0
        %vm317 = vcmask 1043456
        %v319 = vsel %vm317, %v219, 0
        %321 = vmatpush.msra.mxu0 0.0
        %322 = vmatpush.msra.mxu0 0.0
        %323 = vmatpush.msra.mxu0 0.0
        %324 = vmatpush.msra.mxu0 0.0
        %325 = vmatpush.msra.mxu0 0.0
        %326 = vmatpush.msra.mxu0 0.0
        %327 = vmatpush.msra.mxu0 0.0
        %328 = vmatpush.msra.mxu0 0.0
        %329 = vmatpush.msra.mxu0 0.0
        %330 = vmatpush.msra.mxu0 0.0
        %331 = vmatpush.msra.mxu0 0.0
        %332 = vmatpush.msra.mxu0 %v319
        %333 = vmatpush.msra.mxu0 %v218
        %334 = vmatpush.msra.mxu0 %v217
        %335 = vmatpush.msra.mxu0 %v216
        %336 = vmatpush.msra.mxu0 %v215
        %337 = vmatmul.f32.gmra.mxu0 %v222
        %v338 = vpop.f32.mrf.mxu0
        %v339 = vadd.f32 0.0, %v338
        %340 = vmatmul.f32.gmra.mxu0 %v225
        %v341 = vpop.f32.mrf.mxu0
        %v342 = vadd.f32 0.0, %v341
        %343 = vmatmul.f32.gmra.mxu0 %v228
        %v344 = vpop.f32.mrf.mxu0
        %v345 = vadd.f32 0.0, %v344
        %346 = vmatmul.f32.gmra.mxu0 %v231
        %v347 = vpop.f32.mrf.mxu0
        %v348 = vadd.f32 0.0, %v347
        %349 = vmatmul.f32.gmra.mxu0 %v234
        %v350 = vpop.f32.mrf.mxu0
        %v351 = vadd.f32 0.0, %v350
        %352 = vmatmul.f32.gmra.mxu0 %v237
        %v353 = vpop.f32.mrf.mxu0
        %v354 = vadd.f32 0.0, %v353
        %355 = vmatmul.f32.gmra.mxu0 %v240
        %v356 = vpop.f32.mrf.mxu0
        %v357 = vadd.f32 0.0, %v356
        %358 = vmatmul.f32.gmra.mxu0 %v243
        %v359 = vpop.f32.mrf.mxu0
        %v360 = vadd.f32 0.0, %v359
        %361 = vmatmul.f32.gmra.mxu0 %v246
        %v362 = vpop.f32.mrf.mxu0
        %v363 = vadd.f32 0.0, %v362
        %364 = vmatmul.f32.gmra.mxu0 %v249
        %v365 = vpop.f32.mrf.mxu0
        %v366 = vadd.f32 0.0, %v365
        %367 = vmatmul.f32.gmra.mxu0 %v252
        %v368 = vpop.f32.mrf.mxu0
        %v369 = vadd.f32 0.0, %v368
        %370 = vmatmul.f32.gmra.mxu0 %v255
        %v371 = vpop.f32.mrf.mxu0
        %v372 = vadd.f32 0.0, %v371
        %373 = vmatmul.f32.gmra.mxu0 %v258
        %v374 = vpop.f32.mrf.mxu0
        %v375 = vadd.f32 0.0, %v374
        %376 = vmatmul.f32.gmra.mxu0 %v261
        %v377 = vpop.f32.mrf.mxu0
        %v378 = vadd.f32 0.0, %v377
        %379 = vmatmul.f32.gmra.mxu0 %v264
        %v380 = vpop.f32.mrf.mxu0
        %v381 = vadd.f32 0.0, %v380
        %382 = vmatmul.f32.gmra.mxu0 %v267
        %v383 = vpop.f32.mrf.mxu0
        %v384 = vadd.f32 0.0, %v383
        %385 = vmatmul.f32.gmra.mxu0 %v270
        %v386 = vpop.f32.mrf.mxu0
        %v387 = vadd.f32 0.0, %v386
        %388 = vmatmul.f32.gmra.mxu0 %v273
        %v389 = vpop.f32.mrf.mxu0
        %v390 = vadd.f32 0.0, %v389
        %391 = vmatmul.f32.gmra.mxu0 %v276
        %v392 = vpop.f32.mrf.mxu0
        %v393 = vadd.f32 0.0, %v392
        %394 = vmatmul.f32.gmra.mxu0 %v279
        %v395 = vpop.f32.mrf.mxu0
        %v396 = vadd.f32 0.0, %v395
        %397 = vmatmul.f32.gmra.mxu0 %v282
        %v398 = vpop.f32.mrf.mxu0
        %v399 = vadd.f32 0.0, %v398
        %400 = vmatmul.f32.gmra.mxu0 %v285
        %v401 = vpop.f32.mrf.mxu0
        %v402 = vadd.f32 0.0, %v401
        %403 = vmatmul.f32.gmra.mxu0 %v288
        %v404 = vpop.f32.mrf.mxu0
        %v405 = vadd.f32 0.0, %v404
        %406 = vmatmul.f32.gmra.mxu0 %v291
        %v407 = vpop.f32.mrf.mxu0
        %v408 = vadd.f32 0.0, %v407
        %409 = vmatmul.f32.gmra.mxu0 %v294
        %v410 = vpop.f32.mrf.mxu0
        %v411 = vadd.f32 0.0, %v410
        %412 = vmatmul.f32.gmra.mxu0 %v297
        %v413 = vpop.f32.mrf.mxu0
        %v414 = vadd.f32 0.0, %v413
        %415 = vmatmul.f32.gmra.mxu0 %v300
        %v416 = vpop.f32.mrf.mxu0
        %v417 = vadd.f32 0.0, %v416
        %418 = vmatmul.f32.gmra.mxu0 %v303
        %v419 = vpop.f32.mrf.mxu0
        %v420 = vadd.f32 0.0, %v419
        %421 = vmatmul.f32.gmra.mxu0 %v306
        %v422 = vpop.f32.mrf.mxu0
        %v423 = vadd.f32 0.0, %v422
        %424 = vmatmul.f32.gmra.mxu0 %v309
        %v425 = vpop.f32.mrf.mxu0
        %v426 = vadd.f32 0.0, %v425
        %427 = vmatmul.f32.gmra.mxu0 %v312
        %v428 = vpop.f32.mrf.mxu0
        %v429 = vadd.f32 0.0, %v428
        %430 = vmatmul.f32.gmra.mxu0 %v315
        %v431 = vpop.f32.mrf.mxu0
        %v432 = vadd.f32 0.0, %v431
        %433 = vdwg.mxu0
        %434 = vst [vmem:[%s168] sm:$0xff] %v339
        %435 = vst [vmem:[%s168 + $0x8] sm:$0xff] %v342
        %436 = vst [vmem:[%s168 + $0x10] sm:$0xff] %v345
        %437 = vst [vmem:[%s168 + $0x18] sm:$0xff] %v348
        %438 = vst [vmem:[%s168 + $0x20] sm:$0xff] %v351
        %439 = vst [vmem:[%s168 + $0x28] sm:$0xff] %v354
        %440 = vst [vmem:[%s168 + $0x30] sm:$0xff] %v357
        %441 = vst [vmem:[%s168 + $0x38] sm:$0xff] %v360
        %442 = vst [vmem:[%s168 + $0x40] sm:$0xff] %v363
        %443 = vst [vmem:[%s168 + $0x48] sm:$0xff] %v366
        %444 = vst [vmem:[%s168 + $0x50] sm:$0xff] %v369
        %445 = vst [vmem:[%s168 + $0x58] sm:$0xff] %v372
        %446 = vst [vmem:[%s168 + $0x60] sm:$0xff] %v375
        %447 = vst [vmem:[%s168 + $0x68] sm:$0xff] %v378
        %448 = vst [vmem:[%s168 + $0x70] sm:$0xff] %v381
        %449 = vst [vmem:[%s168 + $0x78] sm:$0xff] %v384
        %450 = vst [vmem:[%s168 + $0x80] sm:$0xff] %v387
        %451 = vst [vmem:[%s168 + $0x88] sm:$0xff] %v390
        %452 = vst [vmem:[%s168 + $0x90] sm:$0xff] %v393
        %453 = vst [vmem:[%s168 + $0x98] sm:$0xff] %v396
        %454 = vst [vmem:[%s168 + $0xa0] sm:$0xff] %v399
        %455 = vst [vmem:[%s168 + $0xa8] sm:$0xff] %v402
        %456 = vst [vmem:[%s168 + $0xb0] sm:$0xff] %v405
        %457 = vst [vmem:[%s168 + $0xb8] sm:$0xff] %v408
        %458 = vst [vmem:[%s168 + $0xc0] sm:$0xff] %v411
        %459 = vst [vmem:[%s168 + $0xc8] sm:$0xff] %v414
        %460 = vst [vmem:[%s168 + $0xd0] sm:$0xff] %v417
        %461 = vst [vmem:[%s168 + $0xd8] sm:$0xff] %v420
        %462 = vst [vmem:[%s168 + $0xe0] sm:$0xff] %v423
        %463 = vst [vmem:[%s168 + $0xe8] sm:$0xff] %v426
        %464 = vst [vmem:[%s168 + $0xf0] sm:$0xff] %v429
        %465 = vst [vmem:[%s168 + $0xf8] sm:$0xff] %v432
        %v466 = vadd.f32 %v339, %v342
        %v467 = vadd.f32 %v466, %v345
        %v468 = vadd.f32 %v467, %v348
        %v469 = vadd.f32 %v468, %v351
        %v470 = vadd.f32 %v469, %v354
        %v471 = vadd.f32 %v470, %v357
        %v472 = vadd.f32 %v471, %v360
        %v473 = vadd.f32 %v472, %v363
        %v474 = vadd.f32 %v473, %v366
        %v475 = vadd.f32 %v474, %v369
        %v476 = vadd.f32 %v475, %v372
        %v477 = vadd.f32 %v476, %v375
        %v478 = vadd.f32 %v477, %v378
        %v479 = vadd.f32 %v478, %v381
        %v480 = vadd.f32 %v479, %v384
        %v481 = vadd.f32 %v480, %v387
        %v482 = vadd.f32 %v481, %v390
        %v483 = vadd.f32 %v482, %v393
        %v484 = vadd.f32 %v483, %v396
        %v485 = vadd.f32 %v484, %v399
        %v486 = vadd.f32 %v485, %v402
        %v487 = vadd.f32 %v486, %v405
        %v488 = vadd.f32 %v487, %v408
        %v489 = vadd.f32 %v488, %v411
        %v490 = vadd.f32 %v489, %v414
        %v491 = vadd.f32 %v490, %v417
        %v492 = vadd.f32 %v491, %v420
        %v493 = vadd.f32 %v492, %v423
        %v494 = vadd.f32 %v493, %v426
        %v495 = vadd.f32 %v494, %v429
        %v496 = vadd.f32 %v495, %v432
        %v497 = vrot.slane %v496, 4
        %v498 = vadd.f32 %v496, %v497
        %v499 = vrot.slane %v498, 2
        %v500 = vadd.f32 %v498, %v499
        %v501 = vrot.slane %v500, 1
        %v502 = vadd.f32 %v500, %v501
        %v503 = vmul.f32 %v339, %v339
        %v504 = vmul.f32 %v342, %v342
        %v505 = vmul.f32 %v345, %v345
        %v506 = vmul.f32 %v348, %v348
        %v507 = vmul.f32 %v351, %v351
        %v508 = vmul.f32 %v354, %v354
        %v509 = vmul.f32 %v357, %v357
        %v510 = vmul.f32 %v360, %v360
        %v511 = vmul.f32 %v363, %v363
        %v512 = vmul.f32 %v366, %v366
        %v513 = vmul.f32 %v369, %v369
        %v514 = vmul.f32 %v372, %v372
        %v515 = vmul.f32 %v375, %v375
        %v516 = vmul.f32 %v378, %v378
        %v517 = vmul.f32 %v381, %v381
        %v518 = vmul.f32 %v384, %v384
        %v519 = vmul.f32 %v387, %v387
        %v520 = vmul.f32 %v390, %v390
        %v521 = vmul.f32 %v393, %v393
        %v522 = vmul.f32 %v396, %v396
        %v523 = vmul.f32 %v399, %v399
        %v524 = vmul.f32 %v402, %v402
        %v525 = vmul.f32 %v405, %v405
        %v526 = vmul.f32 %v408, %v408
        %v527 = vmul.f32 %v411, %v411
        %v528 = vmul.f32 %v414, %v414
        %v529 = vmul.f32 %v417, %v417
        %v530 = vmul.f32 %v420, %v420
        %v531 = vmul.f32 %v423, %v423
        %v532 = vmul.f32 %v426, %v426
        %v533 = vmul.f32 %v429, %v429
        %v534 = vmul.f32 %v432, %v432
        %v535 = vadd.f32 %v503, %v504
        %v536 = vadd.f32 %v535, %v505
        %v537 = vadd.f32 %v536, %v506
        %v538 = vadd.f32 %v537, %v507
        %v539 = vadd.f32 %v538, %v508
        %v540 = vadd.f32 %v539, %v509
        %v541 = vadd.f32 %v540, %v510
        %v542 = vadd.f32 %v541, %v511
        %v543 = vadd.f32 %v542, %v512
        %v544 = vadd.f32 %v543, %v513
        %v545 = vadd.f32 %v544, %v514
        %v546 = vadd.f32 %v545, %v515
        %v547 = vadd.f32 %v546, %v516
        %v548 = vadd.f32 %v547, %v517
        %v549 = vadd.f32 %v548, %v518
        %v550 = vadd.f32 %v549, %v519
        %v551 = vadd.f32 %v550, %v520
        %v552 = vadd.f32 %v551, %v521
        %v553 = vadd.f32 %v552, %v522
        %v554 = vadd.f32 %v553, %v523
        %v555 = vadd.f32 %v554, %v524
        %v556 = vadd.f32 %v555, %v525
        %v557 = vadd.f32 %v556, %v526
        %v558 = vadd.f32 %v557, %v527
        %v559 = vadd.f32 %v558, %v528
        %v560 = vadd.f32 %v559, %v529
        %v561 = vadd.f32 %v560, %v530
        %v562 = vadd.f32 %v561, %v531
        %v563 = vadd.f32 %v562, %v532
        %v564 = vadd.f32 %v563, %v533
        %v565 = vadd.f32 %v564, %v534
        %v566 = vrot.slane %v565, 4
        %v567 = vadd.f32 %v565, %v566
        %v568 = vrot.slane %v567, 2
        %v569 = vadd.f32 %v567, %v568
        %v570 = vrot.slane %v569, 1
        %v571 = vadd.f32 %v569, %v570
        %vm572 = vcmask 1040384
        %v573 = vsel %vm572, %v502, %v571
        %574 = vst [vmem:[%s175] sm:$0x3] %v573
        %s575 = sand.u32 %s76, 1
        %s576 = scalar_lea.sflag [#allocation3], %s575
        %s577 = sand.u32 %s76, 1
        %s578 = smul.addr %s577, 256
        %s579 = scalar_lea.vmem [#allocation2], %s578
        %s580 = sand.u32 %s102, 1
        %s581 = scalar_lea.sflag [#allocation5], %s580
        %s582 = sand.u32 %s102, 1
        %s583 = smul.addr %s582, 2
        %s584 = scalar_lea.vmem [#allocation4], %s583
        // Predicated region
        $region29: #{tpu_custom_call.1} parent=27 // pred_check
          %p585 = pneg %p86
        $region30: #{tpu_custom_call.1} parent=27 // pred_check_branch
          %587 = sbr.rel (%p585) target = $region32
        $region31: #{tpu_custom_call.1} parent=27 // pred_region
          %s588 = smul.u32 32, %s21
          %590 = vsyncadd %s576, 0
          %s591 = smul.addr %s588, 8
          %s592 = scalar_lea.hbm %s2, %s591
          %s593 = sshll.u32 %s579, 4
          %s594 = int_to_ptr.vmem [resolvable:$true] %s593
          %s595 = sshll.u32 %s592, 4
          %s596 = int_to_ptr.hbm [resolvable:$true] %s595
          %601 = dma.vmem_to_hbm [thread:$0]  %s594, 4096, %s596, %s576, 128, 128, 8
        $region32: #{tpu_custom_call.1} parent=27 // pred_fallthru
          _
        // Predicated region
        $region33: #{tpu_custom_call.1} parent=27 // pred_check
          %p602 = pneg %p112
        $region34: #{tpu_custom_call.1} parent=27 // pred_check_branch
          %604 = sbr.rel (%p602) target = $region36
        $region35: #{tpu_custom_call.1} parent=27 // pred_region
          %606 = vsyncadd %s581, 0
          %s607 = smul.addr %s21, 2
          %s608 = scalar_lea.hbm %s3, %s607
          %s610 = sshll.u32 %s584, 4
          %s611 = int_to_ptr.vmem [resolvable:$true] %s610
          %s612 = sshll.u32 %s608, 4
          %s613 = int_to_ptr.hbm [resolvable:$true] %s612
          %615 = dma.vmem_to_hbm [thread:$0]  %s611, 32, %s613, %s581
        $region36: #{tpu_custom_call.1} parent=27 // pred_fallthru
          _
      $region28: #{tpu_custom_call.1} parent=5 // pred_fallthru
        _
      %p616 = scmp.le.s32.totalorder 2, %s16
      // Predicated region
      $region37: #{tpu_custom_call.1} parent=5 // pred_check
        %p617 = pneg %p616
      $region38: #{tpu_custom_call.1} parent=5 // pred_check_branch
        %619 = sbr.rel (%p617) target = $region40
      $region39: #{tpu_custom_call.1} parent=5 // pred_region
        %s620 = ssub.s32 %s16, 2
        // Predicated region
        $region41: #{tpu_custom_call.1} parent=39 // pred_check
          %p621 = pneg %p92
        $region42: #{tpu_custom_call.1} parent=39 // pred_check_branch
          %623 = sbr.rel (%p621) target = $region44
        $region43: #{tpu_custom_call.1} parent=39 // pred_region
          %s624 = sand.u32 %s77, 1
          %s625 = scalar_lea.sflag [#allocation3], %s624
          %s626 = sand.u32 %s77, 1
          %s627 = smul.addr %s626, 256
          %s628 = scalar_lea.vmem [#allocation2], %s627
          %630 = dma.done %s625, 4096
        $region44: #{tpu_custom_call.1} parent=39 // pred_fallthru
          _
        // Predicated region
        $region45: #{tpu_custom_call.1} parent=39 // pred_check
          %p631 = pneg %p118
        $region46: #{tpu_custom_call.1} parent=39 // pred_check_branch
          %633 = sbr.rel (%p631) target = $region48
        $region47: #{tpu_custom_call.1} parent=39 // pred_region
          %s634 = sand.u32 %s103, 1
          %s635 = scalar_lea.sflag [#allocation5], %s634
          %s636 = sand.u32 %s103, 1
          %s637 = smul.addr %s636, 2
          %s638 = scalar_lea.vmem [#allocation4], %s637
          %640 = dma.done %s635, 32
        $region48: #{tpu_custom_call.1} parent=39 // pred_fallthru
          _
      $region40: #{tpu_custom_call.1} parent=5 // pred_fallthru
        _
    $region6: #{tpu_custom_call.1} parent=1 // loop_footer
      %s20 = sadd.s32 1, %s16
    $region7: #{tpu_custom_call.1} parent=1 // loop_footer_branch
      %15 = sbr.rel target = $region3
    $region8: #{tpu_custom_call.1} parent=1 // loop_exit
      _
    %641 = vsyncpa [#allocation3], 1
    %s642 = scalar_lea.sflag [#allocation3], 1
    %643 = vsyncpa %s642, 1
    %644 = vsyncpa [#allocation5], 1
    %s645 = scalar_lea.sflag [#allocation5], 1
    %646 = vsyncpa %s645, 1

</llo_original>
